<compile_context>
chip_gen: v5e
topology: v5e:2x2
jax: 0.10.0
libtpu: 0.0.40
codegen_flags: <defaults>
</compile_context>

<pallas_src>
import functools

import numpy as np
import jax
import jax.numpy as jnp
from jax.experimental import pallas as pl
from jax.experimental.pallas import tpu as pltpu


# --------------------------------------------------------------------------- #
# small helpers
# --------------------------------------------------------------------------- #
def _pair(v):
    if isinstance(v, int):
        return v, v
    if len(v) == 2:
        return int(v[0]), int(v[1])
    raise ValueError("expected int or length-2 tuple")


def _round_up(x, m):
    return -(-x // m) * m


def _sublane_quantum(dtype):
    return {4: 8, 2: 16, 1: 32}[jnp.dtype(dtype).itemsize]


def _padded_block_bytes(shape, dtype):
    """VMEM bytes of one pipeline buffer holding `shape` of `dtype`
    (lane padded to 128, second-minor padded to the dtype's sublane quantum)."""
    dtype = jnp.dtype(dtype)
    if len(shape) < 2:
        n = int(shape[0]) if shape else 1
        return _round_up(n, 128) * dtype.itemsize
    lead = 1
    for d in shape[:-2]:
        lead *= int(d)
    s2 = _round_up(int(shape[-2]), _sublane_quantum(dtype))
    s1 = _round_up(int(shape[-1]), 128)
    return lead * s2 * s1 * dtype.itemsize


def _vmem_capacity_bytes():
    try:
        cap = getattr(pltpu.get_tpu_info(), "vmem_capacity_bytes", None)
        if cap:
            return int(cap)
    except Exception:
        pass
    return 64 * 2 ** 20          # conservative default (v7x per-core VMEM)


_VMEM_MARGIN = 4 * 2 ** 20       # headroom for Mosaic internal scratch


def _vmem_budget_bytes(cap):
    # 0.75 * physical, capped: ~96 MiB on v5e/v6e (128 MiB VMEM), ~48 MiB on
    # v7x (64 MiB VMEM) -- always leaves compiler headroom.
    return int(min(96 * 2 ** 20, (3 * cap) // 4))


def _choose_block_rows(d_out, cap_rows, n_batch):
    """Pick (rows-per-block, #blocks) along the output-D axis from a padded
    VMEM row budget; keeps blocked dims 8-aligned and >= 2 parallel grid
    points when possible (both v7x TensorCores)."""
    if d_out <= 8:
        return d_out, 1
    bd = int(max(1, cap_rows))
    if bd >= d_out:
        bd, nd = d_out, 1
    else:
        bd = max(8, (bd // 8) * 8)
        nd = pl.cdiv(d_out, bd)
    if n_batch == 1 and nd == 1:
        bd = min(d_out, _round_up(pl.cdiv(d_out, 2), 8))
        nd = pl.cdiv(d_out, bd)
    return bd, nd


# --------------------------------------------------------------------------- #
# kernels
# --------------------------------------------------------------------------- #
def _pool_mxu_kernel(x_ref, s_ref, o_ref, *, weight_scale):
    """Sum-pooling as one selection matmul on the MXU (f32 accumulation)."""
    rows = o_ref.shape[0]
    x = x_ref[...]
    if x.shape[0] != rows:           # single-block case: input carries padding rows
        x = x[:rows]
    acc = jnp.dot(x, s_ref[...], preferred_element_type=jnp.float32)
    if weight_scale != 1.0:
        acc = acc * jnp.float32(weight_scale)
    o_ref[...] = acc.astype(o_ref.dtype)


def _pool_tap_kernel(x_ref, o_ref, *, kH, kW, sH, sW, dH, dW, weight_scale):
    """Fallback: kH*kW static contiguous slice-adds on the VPU (f32 acc)."""
    bD, W_out, T = o_ref.shape
    rows, W_grp, _ = x_ref.shape
    G = rows // sH
    x = x_ref[...]
    x4 = x.reshape(G, sH, W_grp, x.shape[-1])        # major split: layout no-op
    acc = None
    for i in range(kH):
        qi, ri = divmod(i * dH, sH)
        xi = x4[qi:qi + bD, ri]                       # (bD, W_grp, sW*T)
        for j in range(kW):
            qj, rj = divmod(j * dW, sW)
            tap = xi[:, qj:qj + W_out, rj * T:(rj + 1) * T].astype(jnp.float32)
            acc = tap if acc is None else acc + tap
    if weight_scale != 1.0:
        acc = acc * jnp.float32(weight_scale)
    # TODO(synk): lane-dense (bD, W_out*T) store for this fallback path too.
    o_ref[...] = acc.astype(o_ref.dtype)


# --------------------------------------------------------------------------- #
# forward wrappers
# --------------------------------------------------------------------------- #
def _forward_mxu(x, *, N, D, W2, T, D_out, W_out, kH, kW, sH, sW, dH, dW,
                 pH, pW, W_res, weight_scale, out_dtype, budget, cap):
    itemsize = jnp.dtype(x.dtype).itemsize
    out_itemsize = jnp.dtype(out_dtype).itemsize
    Lin = sH * W_res * T
    Lout = W_out * T

    # Static 0/1 selection matrix: (row-in-group r, padded W column c, t) ->
    # (output column w, t).  Built on host, exact in bf16 (entries are 0/1).
    s_small = np.zeros((sH, W_res, W_out), np.float32)
    w_idx = np.arange(W_out)
    for i in range(kH):
        for j in range(kW):
            s_small[i * dH, w_idx * sW + j * dW, w_idx] += 1.0
    s_mat = np.kron(s_small.reshape(sH * W_res, W_out),
                    np.eye(T, dtype=np.float32))
    s_mat = jnp.asarray(s_mat, dtype=x.dtype)

    # single zero-pad: conv padding (leading) + group/tap alignment (trailing)
    D_grp = max(pl.cdiv(D + pH, sH), D_out)
    rows = D_grp * sH
    x = jnp.pad(x, ((0, 0), (pH, rows - D - pH), (pW, W_res - W2 - pW), (0, 0)))
    # free row-major reshape: lanes carry the whole (sH, W_res, T) tap window
    x = x.reshape(N, D_grp, Lin)

    # block sizing from PADDED footprints: 2x in + 2x out + S + margin <= budget
    s_bytes = _padded_block_bytes((Lin, Lout), s_mat.dtype)
    per_row = (2 * _round_up(Lin, 128) * itemsize
               + 2 * _round_up(Lout, 128) * out_itemsize)
    usable = max(budget - _VMEM_MARGIN - s_bytes, 8 * per_row)
    bD, nD = _choose_block_rows(D_out, usable // per_row, N)
    in_rows, out_rows = (D_grp, D_out) if nD == 1 else (bD, bD)

    need = (2 * _padded_block_bytes((in_rows, Lin), x.dtype)
            + 2 * _padded_block_bytes((out_rows, Lout), out_dtype)
            + s_bytes + _VMEM_MARGIN)
    vmem_limit = int(min(cap, max(32 * 2 ** 20, need)))

    kernel = functools.partial(_pool_mxu_kernel, weight_scale=float(weight_scale))
    cost = pl.CostEstimate(
        flops=int(2 * N * D_grp * Lin * Lout),
        transcendentals=0,
        bytes_accessed=int(x.size * itemsize + s_mat.size * itemsize
                           + N * D_out * Lout * out_itemsize))

    out = pl.pallas_call(
        kernel,
        out_shape=jax.ShapeDtypeStruct((N, D_out, Lout), out_dtype),
        grid=(N, nD),
        in_specs=[pl.BlockSpec((None, in_rows, Lin), lambda n, k: (n, k, 0)),
                  pl.BlockSpec((Lin, Lout), lambda n, k: (0, 0))],
        out_specs=pl.BlockSpec((None, out_rows, Lout), lambda n, k: (n, k, 0)),
        compiler_params=pltpu.CompilerParams(
            dimension_semantics=("parallel", "parallel"),
            vmem_limit_bytes=vmem_limit),
        cost_estimate=cost,
    )(x, s_mat)
    return out.reshape(N, D_out, W_out, T)


def _forward_tap(x, *, N, D, W2, T, D_out, W_out, kH, kW, sH, sW, dH, dW,
                 pH, pW, weight_scale, out_dtype, budget, cap):
    itemsize = jnp.dtype(x.dtype).itemsize
    out_itemsize = jnp.dtype(out_dtype).itemsize

    qD = ((kH - 1) * dH) // sH
    qW = ((kW - 1) * dW) // sW
    D_grp = max(pl.cdiv(D + 2 * pH, sH), D_out + qD)
    W_grp = max(pl.cdiv(W2 + 2 * pW, sW), W_out + qW)
    D_res, W_res = D_grp * sH, W_grp * sW

    x = jnp.pad(x, ((0, 0), (pH, D_res - D - pH), (pW, W_res - W2 - pW), (0, 0)))
    x = x.reshape(N, D_res, W_grp, sW * T)   # free: lanes carry the sW*T phase

    # padded-footprint block sizing
    lane_in = _round_up(sW * T, 128)
    sub_in = _sublane_quantum(x.dtype)
    per_row_in = sH * _round_up(W_grp, sub_in) * lane_in * itemsize
    per_row_out = (_round_up(W_out, _sublane_quantum(out_dtype))
                   * _round_up(T, 128) * out_itemsize)
    if qD == 0:
        per_row = 2 * per_row_in + 2 * per_row_out
        usable = max(budget - _VMEM_MARGIN, 8 * per_row)
        bD, nD = _choose_block_rows(D_out, usable // per_row, N)
        block_rows = bD * sH
    else:
        # TODO(synk): halo tiling for overlapping D windows (stride < kernel *
        # dilation); currently the whole C*H slab is loaded per batch element.
        bD, nD = D_out, 1
        block_rows = D_res

    need = (2 * block_rows * _round_up(W_grp, sub_in) * lane_in * itemsize
            + 2 * bD * per_row_out + _VMEM_MARGIN)
    vmem_limit = int(min(cap, max(32 * 2 ** 20, need)))

    kernel = functools.partial(
        _pool_tap_kernel, kH=kH, kW=kW, sH=sH, sW=sW, dH=dH, dW=dW,
        weight_scale=float(weight_scale))
    cost = pl.CostEstimate(
        flops=int(2 * N * D_out * W_out * T * kH * kW),
        transcendentals=0,
        bytes_accessed=int(x.size * itemsize
                           + N * D_out * W_out * T * out_itemsize))

    out = pl.pallas_call(
        kernel,
        out_shape=jax.ShapeDtypeStruct((N, D_out, W_out, T), out_dtype),
        grid=(N, nD),
        in_specs=[pl.BlockSpec((None, block_rows, W_grp, sW * T),
                               lambda n, k: (n, k, 0, 0))],
        out_specs=pl.BlockSpec((None, bD, W_out, T), lambda n, k: (n, k, 0, 0)),
        compiler_params=pltpu.CompilerParams(
            dimension_semantics=("parallel", "parallel"),
            vmem_limit_bytes=vmem_limit),
        cost_estimate=cost,
    )(x)
    return out


def pool_forward(x, kernel_size, stride=None, padding=0, dilation=1,
                 weight_scale=1.0):
    """JAX/Pallas equivalent of Pool.forward.  x: (N, C, H, W, T) -> NCHWT."""
    # TODO(synk): pre_hook_fx (weight quantization hook) and weight_norm are not
    # modeled; with the constant ones-weight they are identity at init.
    kH, kW = _pair(kernel_size)
    sH, sW = (kH, kW) if stride is None else _pair(stride)
    pH, pW = _pair(padding)
    dH, dW = _pair(dilation)

    x = jnp.asarray(x)
    if x.dtype not in (jnp.bfloat16, jnp.float32):
        x = x.astype(jnp.float32)
    out_dtype = x.dtype
    N, C, H, W, T = x.shape

    # bug-compatible trailing zero-pad of the torch module (pads by H%kH, W%kW)
    eH, eW = H % kH, W % kW
    if eH or eW:
        x = jnp.pad(x, ((0, 0), (0, 0), (0, eH), (0, eW), (0, 0)))
    H2, W2 = H + eH, W + eW
    D = C * H2
    x = x.reshape(N, D, W2, T)       # flatten C,H exactly like the conv3d path

    D_pad, W_pad = D + 2 * pH, W2 + 2 * pW
    D_out = (D_pad - dH * (kH - 1) - 1) // sH + 1
    W_out = (W_pad - dW * (kW - 1) - 1) // sW + 1
    if D_out <= 0 or W_out <= 0:
        raise ValueError("pooling produces an empty output")

    cap = _vmem_capacity_bytes()
    budget = _vmem_budget_bytes(cap)
    common = dict(N=N, D=D, W2=W2, T=T, D_out=D_out, W_out=W_out,
                  kH=kH, kW=kW, sH=sH, sW=sW, dH=dH, dW=dW, pH=pH, pW=pW,
                  weight_scale=weight_scale, out_dtype=out_dtype,
                  budget=budget, cap=cap)

    # MXU path: needs non-overlapping D windows ((kH-1)*dH < sH) and a
    # selection matmul that stays well under the HBM-roofline flop budget
    # (also bounded so S itself stays small in VMEM).
    qD = ((kH - 1) * dH) // sH
    W_res = max(W_pad, (W_out - 1) * sW + (kW - 1) * dW + 1)
    s_raw_bytes = sH * W_res * T * W_out * T * jnp.dtype(x.dtype).itemsize
    use_mxu = (qD == 0) and (2 * W_out * T <= 768) and (s_raw_bytes <= 6 * 2 ** 20)

    if use_mxu:
        out = _forward_mxu(x, W_res=W_res, **common)
    else:
        out = _forward_tap(x, **common)

    # same row-major regrouping as torch's result.reshape((N, C, -1, Ho, Wo))
    return out.reshape(N, C, -1, W_out, T)


# --------------------------------------------------------------------------- #
# independent pure-JAX reference (mirrors the torch F.conv3d path)
# --------------------------------------------------------------------------- #
def _reference(x, kernel_size, stride=None, padding=0, dilation=1,
               weight_scale=1.0):
    kH, kW = _pair(kernel_size)
    sH, sW = (kH, kW) if stride is None else _pair(stride)
    pH, pW = _pair(padding)
    dH, dW = _pair(dilation)

    x = jnp.asarray(x, jnp.float32)
    if x.shape[2] % kH != 0:
        x = jnp.pad(x, ((0, 0), (0, 0), (0, x.shape[2] % kH), (0, 0), (0, 0)))
    if x.shape[3] % kW != 0:
        x = jnp.pad(x, ((0, 0), (0, 0), (0, 0), (0, x.shape[3] % kW), (0, 0)))
    N, C, H2, W2, T = x.shape
    lhs = x.reshape(N, 1, C * H2, W2, T)
    w = weight_scale * jnp.ones((1, 1, kH, kW, 1), jnp.float32)
    res = jax.lax.conv_general_dilated(
        lhs, w, window_strides=(sH, sW, 1),
        padding=[(pH, pH), (pW, pW), (0, 0)],
        rhs_dilation=(dH, dW, 1),
        dimension_numbers=("NCDHW", "OIDHW", "NCDHW"))
    return res.reshape(N, C, -1, res.shape[3], res.shape[4])


if __name__ == "__main__":
    key = jax.random.PRNGKey(0)
    k1, k2, k3 = jax.random.split(key, 3)
    N, C, H, W, T = 2, 4, 16, 16, 8

    # 1) default 2x2 sum pooling, weight_scale=2, bf16 binary spikes (MXU path)
    x1 = (jax.random.uniform(k1, (N, C, H, W, T)) < 0.3).astype(jnp.bfloat16)
    out1 = jax.block_until_ready(pool_forward(x1, 2, weight_scale=2.0))
    ref1 = _reference(x1, 2, weight_scale=2.0)
    assert out1.shape == (N, C, H // 2, W // 2, T), out1.shape
    np.testing.assert_allclose(np.asarray(out1.astype(jnp.float32)),
                               np.asarray(ref1), rtol=1e-6, atol=1e-6)

    # 2) odd H (module's trailing pad), W padding + W dilation (MXU path)
    x2 = (jax.random.uniform(k2, (N, C, 15, W, T)) < 0.4).astype(jnp.bfloat16)
    out2 = jax.block_until_ready(
        pool_forward(x2, (2, 2), stride=(2, 2), padding=(0, 1), dilation=(1, 2)))
    ref2 = _reference(x2, (2, 2), stride=(2, 2), padding=(0, 1), dilation=(1, 2))
    assert out2.shape == ref2.shape, (out2.shape, ref2.shape)
    np.testing.assert_allclose(np.asarray(out2.astype(jnp.float32)),
                               np.asarray(ref2), rtol=1e-6, atol=1e-6)

    # 3) overlapping D windows (stride < kernel along H) -> VPU tap fallback
    x3 = (jax.random.uniform(k3, (N, C, H, W, T)) < 0.3).astype(jnp.float32)
    out3 = jax.block_until_ready(
        pool_forward(x3, (3, 2), stride=(2, 2), padding=(3, 0)))
    ref3 = _reference(x3, (3, 2), stride=(2, 2), padding=(3, 0))
    assert out3.shape == ref3.shape, (out3.shape, ref3.shape)
    np.testing.assert_allclose(np.asarray(out3), np.asarray(ref3),
                               rtol=1e-6, atol=1e-6)

    print("KERNEL_OK")
</pallas_src>

<mosaic_0001>
module attributes {stable_mosaic.version = 11 : i64} {
  func.func @_pool_mxu_kernel(%arg0: i32, %arg1: i32, %arg2: memref<1x32x256xbf16, #tpu.memory_space<vmem>>, %arg3: memref<256x64xbf16, #tpu.memory_space<vmem>>, %arg4: memref<1x32x64xbf16, #tpu.memory_space<vmem>>) attributes {dimension_semantics = [#tpu.dimension_semantics<parallel>, #tpu.dimension_semantics<parallel>], iteration_bounds = array<i64: 2, 1>, scalar_prefetch = 0 : i64, scratch_operands = 0 : i64, tpu.core_type = #tpu.core_type<tc>, window_params = [{transform_indices = @transform_0, window_bounds = array<i64: 1, 32, 256>}, {pipeline_mode = #tpu.pipeline_mode<synchronous>, transform_indices = @transform_1, window_bounds = array<i64: 256, 64>}, {transform_indices = @transform_2, window_bounds = array<i64: 1, 32, 64>}]} {
    %c0 = arith.constant 0 : index
    %c0_0 = arith.constant 0 : index
    %c0_1 = arith.constant 0 : index
    %0 = vector.load %arg2[%c0, %c0_0, %c0_1] : memref<1x32x256xbf16, #tpu.memory_space<vmem>>, vector<1x32x256xbf16>
    %1 = vector.shape_cast %0 : vector<1x32x256xbf16> to vector<32x256xbf16>
    %c0_2 = arith.constant 0 : index
    %c0_3 = arith.constant 0 : index
    %2 = vector.load %arg3[%c0_2, %c0_3] : memref<256x64xbf16, #tpu.memory_space<vmem>>, vector<256x64xbf16>
    %cst = arith.constant dense<0.000000e+00> : vector<32x64xf32>
    %3 = tpu.matmul %1, %2, %cst {dimension_numbers = #tpu.dot_dimension_numbers<[1], [0], [0], [1], [0, 0, 1, 1], [], []>} : vector<32x256xbf16>, vector<256x64xbf16>, vector<32x64xf32> -> vector<32x64xf32>
    %cst_4 = arith.constant 2.000000e+00 : f32
    %4 = vector.broadcast %cst_4 : f32 to vector<32x64xf32>
    %5 = arith.mulf %3, %4 : vector<32x64xf32>
    %6 = arith.truncf %5 : vector<32x64xf32> to vector<32x64xbf16>
    %c0_5 = arith.constant 0 : index
    %c0_6 = arith.constant 0 : index
    %c0_7 = arith.constant 0 : index
    %7 = vector.load %arg4[%c0_5, %c0_6, %c0_7] : memref<1x32x64xbf16, #tpu.memory_space<vmem>>, vector<1x32x64xbf16>
    %8 = vector.shape_cast %7 : vector<1x32x64xbf16> to vector<32x64xbf16>
    %9 = vector.shape_cast %6 : vector<32x64xbf16> to vector<1x32x64xbf16>
    tpu.vector_store %arg4[%c0_5, %c0_6, %c0_7], %9 {strides = array<i32>} : memref<1x32x64xbf16, #tpu.memory_space<vmem>>, vector<1x32x64xbf16>,
    return
  }
  func.func @transform_0(%arg0: i32, %arg1: i32) -> (i32, i32, i32) {
    %c0_i32 = arith.constant 0 : i32
    %c0_i32_0 = arith.constant 0 : i32
    return %arg0, %arg1, %c0_i32 : i32, i32, i32
  }
  func.func @transform_1(%arg0: i32, %arg1: i32) -> (i32, i32) {
    %c0_i32 = arith.constant 0 : i32
    %c0_i32_0 = arith.constant 0 : i32
    %c0_i32_1 = arith.constant 0 : i32
    return %c0_i32, %c0_i32_0 : i32, i32
  }
  func.func @transform_2(%arg0: i32, %arg1: i32) -> (i32, i32, i32) {
    %c0_i32 = arith.constant 0 : i32
    %c0_i32_0 = arith.constant 0 : i32
    return %arg0, %arg1, %c0_i32 : i32, i32, i32
  }
}

</mosaic_0001>

<llo_original>
// kernel: tpu_custom_call.1
$region0: #{tpu_custom_call.1}
  #allocation0 [shape = 'u32[]', space=smem, size = 0x4, offset = 0x4, fixed_abs, tag = 'smem constant byte address 0x4 - core index']
  #allocation1 [shape = 'u32[72,128]{1,0:T(1,128)}', space=vmem, size = 0x9000, scoped, tag = 'internal scratch']
  %s0 = inlined_call_operand.vmem [shape: bf16[2,32,256], index: 0, kind: input, shape index: {}]
  %s1 = inlined_call_operand.vmem [shape: bf16[256,64], index: 1, kind: input, shape index: {}]
  %s2 = inlined_call_operand.hbm [shape: bf16[2,32,64], index: 2, kind: output, shape index: {}]
  %s3 = sld [smem:[#allocation0]]
  $region41: #{tpu_custom_call.1} parent=0
    _
  %s5 = ssub.s32 1, %s3
  %s6 = scalar_select 0, %s5, %s3
  $region1: #{tpu_custom_call.1} parent=0
    #allocation2 [shape = 'u8[16384]{0}', space=vmem, size = 0x4000, scoped, tag = 'output window, operand 0']
    #allocation3 [shape = 's32[2]{0}', space=sflag, size = 0x8, scoped, tag = 'scoped memory for tpu_custom_call.1']
    %7 = vsyncpa [#allocation3], 0
    %s8 = scalar_lea.sflag [#allocation3], 1
    %9 = vsyncpa %s8, 0
    loop: start=0, step=1, limit=4
    $region2: #{tpu_custom_call.1} parent=1 // loop_pre_header
      _
    $region3: #{tpu_custom_call.1} parent=1 // loop_header
      %s11 = sphi 0, %s15
      %p12 = scmp.ge.s32.totalorder %s11, 4
      %s18 = sphi 0, %s30
      %s19 = sphi 0, %s26
      %s20 = sphi 0, %s18
      %s21 = sphi 0, %s19
      %s22 = sphi 0, %s20
      %s23 = sphi 0, %s21
      %s35 = sphi 0, %s37
      %s38 = sphi 0, %s35
      %s39 = sphi 0, %s38
      %s55 = sphi 0, %s39
      %s59 = sphi 0, %s59
      %s61 = sphi 0, %s59
      %s62 = sphi 0, %s61
      %s76 = sphi 0, %s62
      %s84 = sphi 0, %s86
      %s87 = sphi 0, %s84
      %s88 = sphi 0, %s87
      %s104 = sphi 0, %s88
    $region4: #{tpu_custom_call.1} parent=1 // loop_header_branch
      %14 = sbr.rel (%p12) target = $region8
    $region5: #{tpu_custom_call.1} parent=1 // loop_body
      %s16 = ssub.s32 %s11, 1
      %s17 = ssub.s32 %s11, 2
      %s24 = sadd.s32 1, %s19
      %p25 = scmp.ge.s32.totalorder %s24, 1
      %s26 = scalar_select %p25, 0, %s24
      %s27 = sadd.s32 1, %s18
      %s28 = scalar_select %p25, %s27, %s18
      %p29 = scmp.ge.s32.totalorder %s28, 2
      %s30 = scalar_select %p29, 0, %s28
      %s31 = ssub.s32 %s18, %s30
      %s32 = ssub.s32 %s19, %s26
      %s33 = sor.u32 %s31, %s32
      %p34 = scmp.eq.s32.totalorder %s33, 0
      %s36 = sadd.s32 %s35, 1
      %s37 = scalar_select %p34, %s35, %s36
      %p40 = pneg %p34
      %p41 = scmp.eq.s32.totalorder %s11, 1
      %p42 = por %p40, %p41
      %p43 = scmp.ne.s32.totalorder %s35, %s38
      %p44 = scmp.eq.s32.totalorder %s11, 0
      %p45 = por %p43, %p44
      %p46 = scmp.ne.s32.totalorder %s35, %s38
      %p47 = scmp.eq.s32.totalorder %s16, 1
      %p48 = por %p46, %p47
      %p49 = scmp.ne.s32.totalorder %s38, %s39
      %p50 = scmp.eq.s32.totalorder %s16, 0
      %p51 = por %p49, %p50
      %p52 = scmp.ne.s32.totalorder %s38, %s39
      %p53 = scmp.eq.s32.totalorder %s17, 1
      %p54 = por %p52, %p53
      %p56 = scmp.ne.s32.totalorder %s39, %s55
      %p57 = scmp.eq.s32.totalorder %s17, 0
      %p58 = por %p56, %p57
      %s60 = sadd.s32 %s59, 1
      %p63 = scmp.eq.s32.totalorder %s11, 1
      %p64 = scmp.ne.s32.totalorder %s59, %s61
      %p65 = scmp.eq.s32.totalorder %s11, 0
      %p66 = por %p64, %p65
      %p67 = scmp.ne.s32.totalorder %s59, %s61
      %p68 = scmp.eq.s32.totalorder %s16, 1
      %p69 = por %p67, %p68
      %p70 = scmp.ne.s32.totalorder %s61, %s62
      %p71 = scmp.eq.s32.totalorder %s16, 0
      %p72 = por %p70, %p71
      %p73 = scmp.ne.s32.totalorder %s61, %s62
      %p74 = scmp.eq.s32.totalorder %s17, 1
      %p75 = por %p73, %p74
      %p77 = scmp.ne.s32.totalorder %s62, %s76
      %p78 = scmp.eq.s32.totalorder %s17, 0
      %p79 = por %p77, %p78
      %s80 = ssub.s32 %s18, %s30
      %s81 = ssub.s32 %s19, %s26
      %s82 = sor.u32 %s80, %s81
      %p83 = scmp.eq.s32.totalorder %s82, 0
      %s85 = sadd.s32 %s84, 1
      %s86 = scalar_select %p83, %s84, %s85
      %p89 = pneg %p83
      %p90 = scmp.eq.s32.totalorder %s11, 1
      %p91 = por %p89, %p90
      %p92 = scmp.ne.s32.totalorder %s84, %s87
      %p93 = scmp.eq.s32.totalorder %s11, 0
      %p94 = por %p92, %p93
      %p95 = scmp.ne.s32.totalorder %s84, %s87
      %p96 = scmp.eq.s32.totalorder %s16, 1
      %p97 = por %p95, %p96
      %p98 = scmp.ne.s32.totalorder %s87, %s88
      %p99 = scmp.eq.s32.totalorder %s16, 0
      %p100 = por %p98, %p99
      %p101 = scmp.ne.s32.totalorder %s87, %s88
      %p102 = scmp.eq.s32.totalorder %s17, 1
      %p103 = por %p101, %p102
      %p105 = scmp.ne.s32.totalorder %s88, %s104
      %p106 = scmp.eq.s32.totalorder %s17, 0
      %p107 = por %p105, %p106
      %p108 = scmp.le.s32.totalorder 1, %s11
      %p109 = scmp.lt.s32.totalorder %s11, 3
      %p110 = pnand %p108, %p109
      %p111 = pneg %p110
      // Predicated region
      $region9: #{tpu_custom_call.1} parent=5 // pred_check
        _
      $region10: #{tpu_custom_call.1} parent=5 // pred_check_branch
        %113 = sbr.rel (%p110) target = $region12
      $region11: #{tpu_custom_call.1} parent=5 // pred_region
        %s114 = ssub.s32 %s11, 1
        // Predicated region
        $region13: #{tpu_custom_call.1} parent=11 // pred_check
          %p115 = pneg %p72
        $region14: #{tpu_custom_call.1} parent=11 // pred_check_branch
          %117 = sbr.rel (%p115) target = $region16
        $region15: #{tpu_custom_call.1} parent=11 // pred_region
          _
        $region16: #{tpu_custom_call.1} parent=11 // pred_fallthru
          _
      $region12: #{tpu_custom_call.1} parent=5 // pred_fallthru
        _
      %p118 = scmp.lt.s32.totalorder %s11, 2
      // Predicated region
      $region17: #{tpu_custom_call.1} parent=5 // pred_check
        %p119 = pneg %p118
      $region18: #{tpu_custom_call.1} parent=5 // pred_check_branch
        %121 = sbr.rel (%p119) target = $region20
      $region19: #{tpu_custom_call.1} parent=5 // pred_region
        // Predicated region
        $region21: #{tpu_custom_call.1} parent=19 // pred_check
          %p122 = pneg %p45
        $region22: #{tpu_custom_call.1} parent=19 // pred_check_branch
          %124 = sbr.rel (%p122) target = $region24
        $region23: #{tpu_custom_call.1} parent=19 // pred_region
          %s125 = smul.u32 4, %s19
          %p126 = scmp.lt.s32.totalorder %s18, 1
          %s127 = scalar_select %p126, %s18, 1
          %p128 = scmp.lt.s32.totalorder %s125, 3
          %s129 = scalar_select %p128, %s125, 3
          %s130 = smul.addr %s129, 2
          %s131 = smul.addr %s127, 8
          %s132 = sadd.s32 %s130, %s131
          %s133 = smul.addr %s132, 4
          %s134 = scalar_lea.vmem %s0, %s133
          %s135 = smul.u32 4, %s19
        $region24: #{tpu_custom_call.1} parent=19 // pred_fallthru
          _
      $region20: #{tpu_custom_call.1} parent=5 // pred_fallthru
        _
      %p136 = scmp.le.s32.totalorder 1, %s11
      %p137 = scmp.lt.s32.totalorder %s11, 3
      %p138 = pnand %p136, %p137
      %p139 = pneg %p138
      // Predicated region
      $region25: #{tpu_custom_call.1} parent=5 // pred_check
        _
      $region26: #{tpu_custom_call.1} parent=5 // pred_check_branch
        %141 = sbr.rel (%p138) target = $region28
      $region27: #{tpu_custom_call.1} parent=5 // pred_region
        %s142 = ssub.s32 %s11, 1
        %s143 = smul.u32 4, %s21
        %p144 = scmp.lt.s32.totalorder %s20, 1
        %s145 = scalar_select %p144, %s20, 1
        %p146 = scmp.lt.s32.totalorder %s143, 3
        %s147 = scalar_select %p146, %s143, 3
        %s148 = smul.addr %s147, 2
        %s149 = smul.addr %s145, 8
        %s150 = sadd.s32 %s148, %s149
        %s151 = smul.addr %s150, 4
        %s152 = scalar_lea.vmem %s0, %s151
        %p153 = pneg %p51
        %p154 = pneg %p48
        %p155 = pneg %p72
        %p156 = pneg %p69
        %p157 = pneg %p100
        %p158 = pneg %p97
        %s159 = sand.u32 %s87, 1
        %s160 = scalar_lea.sflag [#allocation3], %s159
        %s161 = sand.u32 %s87, 1
        %s162 = smul.addr %s161, 16
        %s163 = scalar_lea.vmem [#allocation2], %s162
        %s164 = smul.u32 4, %s21
        %p165 = scmp.lt.s32.totalorder %s20, 1
        %s166 = scalar_select %p165, %s20, 1
        %p167 = scmp.lt.s32.totalorder %s164, 3
        %s168 = scalar_select %p167, %s164, 3
        %s169 = smul.addr %s168, 2
        %s170 = smul.addr %s166, 8
        %s171 = sadd.s32 %s169, %s170
        %s172 = smul.addr %s171, 4
        %s173 = scalar_lea.vmem %s0, %s172
        %s174 = smul.u32 4, %s21
        %s175 = smul.u32 4, %s21
        %v176 = vld [vmem:[%s173] sm:$0xff]
        %v177 = vld [vmem:[%s173 + $0x8] sm:$0xff]
        %v178 = vld [vmem:[%s173 + $0x10] sm:$0xff]
        %v179 = vld [vmem:[%s173 + $0x18] sm:$0xff]
        %v180 = vld [vmem:[%s1] sm:$0xf]
        %v181 = vld [vmem:[%s1 + $0x4] sm:$0xf]
        %v182 = vld [vmem:[%s1 + $0x8] sm:$0xf]
        %v183 = vld [vmem:[%s1 + $0xc] sm:$0xf]
        %v184 = vld [vmem:[%s1 + $0x10] sm:$0xf]
        %v185 = vld [vmem:[%s1 + $0x14] sm:$0xf]
        %v186 = vld [vmem:[%s1 + $0x18] sm:$0xf]
        %v187 = vld [vmem:[%s1 + $0x1c] sm:$0xf]
        %v188 = vld [vmem:[%s1 + $0x20] sm:$0xf]
        %v189 = vld [vmem:[%s1 + $0x24] sm:$0xf]
        %v190 = vld [vmem:[%s1 + $0x28] sm:$0xf]
        %v191 = vld [vmem:[%s1 + $0x2c] sm:$0xf]
        %v192 = vld [vmem:[%s1 + $0x30] sm:$0xf]
        %v193 = vld [vmem:[%s1 + $0x34] sm:$0xf]
        %v194 = vld [vmem:[%s1 + $0x38] sm:$0xf]
        %v195 = vld [vmem:[%s1 + $0x3c] sm:$0xf]
        %v196 = vld [vmem:[%s1 + $0x40] sm:$0xf]
        %v197 = vld [vmem:[%s1 + $0x44] sm:$0xf]
        %v198 = vld [vmem:[%s1 + $0x48] sm:$0xf]
        %v199 = vld [vmem:[%s1 + $0x4c] sm:$0xf]
        %v200 = vld [vmem:[%s1 + $0x50] sm:$0xf]
        %v201 = vld [vmem:[%s1 + $0x54] sm:$0xf]
        %v202 = vld [vmem:[%s1 + $0x58] sm:$0xf]
        %v203 = vld [vmem:[%s1 + $0x5c] sm:$0xf]
        %v204 = vld [vmem:[%s1 + $0x60] sm:$0xf]
        %v205 = vld [vmem:[%s1 + $0x64] sm:$0xf]
        %v206 = vld [vmem:[%s1 + $0x68] sm:$0xf]
        %v207 = vld [vmem:[%s1 + $0x6c] sm:$0xf]
        %v208 = vld [vmem:[%s1 + $0x70] sm:$0xf]
        %v209 = vld [vmem:[%s1 + $0x74] sm:$0xf]
        %v210 = vld [vmem:[%s1 + $0x78] sm:$0xf]
        %v211 = vld [vmem:[%s1 + $0x7c] sm:$0xf]
        %v216 = vunpack.c.l.b16 %v176
        %v217 = vunpack.c.h.b16 %v176
        %v218 = vunpack.c.l.b16 %v177
        %v219 = vunpack.c.h.b16 %v177
        %v220 = vunpack.c.l.b16 %v178
        %v221 = vunpack.c.h.b16 %v178
        %v222 = vunpack.c.l.b16 %v179
        %v223 = vunpack.c.h.b16 %v179
        %v224 = vpack.c.b16 %v218, %v216
        %v225 = vpack.c.b16 %v219, %v217
        %v226 = vpack.c.b16 %v222, %v220
        %v227 = vpack.c.b16 %v223, %v221
        %v264 = vunpack.c.l.b16 %v180
        %v265 = vunpack.c.l.b16 %v181
        %v266 = vunpack.c.l.b16 %v182
        %v267 = vunpack.c.l.b16 %v183
        %v268 = vunpack.c.l.b16 %v184
        %v269 = vunpack.c.l.b16 %v185
        %v270 = vunpack.c.l.b16 %v186
        %v271 = vunpack.c.l.b16 %v187
        %v272 = vunpack.c.l.b16 %v188
        %v273 = vunpack.c.l.b16 %v189
        %v274 = vunpack.c.l.b16 %v190
        %v275 = vunpack.c.l.b16 %v191
        %v276 = vunpack.c.l.b16 %v192
        %v277 = vunpack.c.l.b16 %v193
        %v278 = vunpack.c.l.b16 %v194
        %v279 = vunpack.c.l.b16 %v195
        %v280 = vunpack.c.l.b16 %v196
        %v281 = vunpack.c.l.b16 %v197
        %v282 = vunpack.c.l.b16 %v198
        %v283 = vunpack.c.l.b16 %v199
        %v284 = vunpack.c.l.b16 %v200
        %v285 = vunpack.c.l.b16 %v201
        %v286 = vunpack.c.l.b16 %v202
        %v287 = vunpack.c.l.b16 %v203
        %v288 = vunpack.c.l.b16 %v204
        %v289 = vunpack.c.l.b16 %v205
        %v290 = vunpack.c.l.b16 %v206
        %v291 = vunpack.c.l.b16 %v207
        %v292 = vunpack.c.l.b16 %v208
        %v293 = vunpack.c.l.b16 %v209
        %v294 = vunpack.c.l.b16 %v210
        %v295 = vunpack.c.l.b16 %v211
        %v296 = vpack.c.b16 %v265, %v264
        %v297 = vpack.c.b16 %v267, %v266
        %v298 = vpack.c.b16 %v269, %v268
        %v299 = vpack.c.b16 %v271, %v270
        %v300 = vpack.c.b16 %v273, %v272
        %v301 = vpack.c.b16 %v275, %v274
        %v302 = vpack.c.b16 %v277, %v276
        %v303 = vpack.c.b16 %v279, %v278
        %v304 = vpack.c.b16 %v281, %v280
        %v305 = vpack.c.b16 %v283, %v282
        %v306 = vpack.c.b16 %v285, %v284
        %v307 = vpack.c.b16 %v287, %v286
        %v308 = vpack.c.b16 %v289, %v288
        %v309 = vpack.c.b16 %v291, %v290
        %v310 = vpack.c.b16 %v293, %v292
        %v311 = vpack.c.b16 %v295, %v294
        %328 = vmatpush.bf16.msra.mxu0 %v303
        %329 = vmatpush.bf16.msra.mxu0 %v302
        %330 = vmatpush.bf16.msra.mxu0 %v301
        %331 = vmatpush.bf16.msra.mxu0 %v300
        %332 = vmatpush.bf16.msra.mxu0 %v299
        %333 = vmatpush.bf16.msra.mxu0 %v298
        %334 = vmatpush.bf16.msra.mxu0 %v297
        %335 = vmatpush.bf16.msra.mxu0 %v296
        %336 = vmatmul.bf16.gmra.mxu0 %v224
        %v337 = vpop.f32.mrf.mxu0
        %v338 = vadd.f32 0.0, %v337
        %v339 = vpop.f32.mrf.mxu0
        %v340 = vadd.f32 0.0, %v339
        %341 = vmatmul.bf16.gmra.mxu0 %v226
        %v342 = vpop.f32.mrf.mxu0
        %v343 = vadd.f32 0.0, %v342
        %v344 = vpop.f32.mrf.mxu0
        %v345 = vadd.f32 0.0, %v344
        %346 = vdwg.mxu0
        %347 = vmatpush.bf16.msra.mxu0 %v311
        %348 = vmatpush.bf16.msra.mxu0 %v310
        %349 = vmatpush.bf16.msra.mxu0 %v309
        %350 = vmatpush.bf16.msra.mxu0 %v308
        %351 = vmatpush.bf16.msra.mxu0 %v307
        %352 = vmatpush.bf16.msra.mxu0 %v306
        %353 = vmatpush.bf16.msra.mxu0 %v305
        %354 = vmatpush.bf16.msra.mxu0 %v304
        %355 = vmatmul.bf16.gmra.mxu0 %v225
        %v356 = vpop.f32.mrf.mxu0
        %v357 = vadd.f32 %v338, %v356
        %v358 = vpop.f32.mrf.mxu0
        %v359 = vadd.f32 %v340, %v358
        %360 = vmatmul.bf16.gmra.mxu0 %v227
        %v361 = vpop.f32.mrf.mxu0
        %v362 = vadd.f32 %v343, %v361
        %v363 = vpop.f32.mrf.mxu0
        %v364 = vadd.f32 %v345, %v363
        %365 = vdwg.mxu0
        %v366 = vmul.f32 %v357, 2.0
        %v367 = vmul.f32 %v359, 2.0
        %v368 = vmul.f32 %v362, 2.0
        %v369 = vmul.f32 %v364, 2.0
        %v370 = vpack.c.bf16 %v366, %v366
        %v371 = vpack.c.bf16 %v367, %v367
        %v372 = vpack.c.bf16 %v368, %v368
        %v373 = vpack.c.bf16 %v369, %v369
        %vm374 = vcmask 519168
        %375 = vst.msk [vmem:[%s163] sm:$0xf] %vm374, %v370
        %376 = vst.msk [vmem:[%s163 + $0x4] sm:$0xf] %vm374, %v371
        %377 = vst.msk [vmem:[%s163 + $0x8] sm:$0xf] %vm374, %v372
        %378 = vst.msk [vmem:[%s163 + $0xc] sm:$0xf] %vm374, %v373
        %s379 = sand.u32 %s87, 1
        %s380 = scalar_lea.sflag [#allocation3], %s379
        %s381 = sand.u32 %s87, 1
        %s382 = smul.addr %s381, 16
        %s383 = scalar_lea.vmem [#allocation2], %s382
        // Predicated region
        $region29: #{tpu_custom_call.1} parent=27 // pred_check
          %p384 = pneg %p97
        $region30: #{tpu_custom_call.1} parent=27 // pred_check_branch
          %386 = sbr.rel (%p384) target = $region32
        $region31: #{tpu_custom_call.1} parent=27 // pred_region
          %s387 = smul.u32 4, %s21
          %389 = vsyncadd %s380, 0
          %s390 = smul.addr %s20, 4
          %s391 = sadd.s32 %s387, %s390
          %s392 = smul.addr %s391, 4
          %s393 = scalar_lea.hbm %s2, %s392
          %s394 = sshll.u32 %s383, 4
          %s395 = int_to_ptr.vmem [resolvable:$true] %s394
          %s396 = sshll.u32 %s393, 4
          %s397 = int_to_ptr.hbm [resolvable:$true] %s396
          %402 = dma.vmem_to_hbm [thread:$0]  %s395, 256, %s397, %s380, 64, 64, 4
        $region32: #{tpu_custom_call.1} parent=27 // pred_fallthru
          _
      $region28: #{tpu_custom_call.1} parent=5 // pred_fallthru
        _
      %p403 = scmp.le.s32.totalorder 2, %s11
      // Predicated region
      $region33: #{tpu_custom_call.1} parent=5 // pred_check
        %p404 = pneg %p403
      $region34: #{tpu_custom_call.1} parent=5 // pred_check_branch
        %406 = sbr.rel (%p404) target = $region36
      $region35: #{tpu_custom_call.1} parent=5 // pred_region
        %s407 = ssub.s32 %s11, 2
        // Predicated region
        $region37: #{tpu_custom_call.1} parent=35 // pred_check
          %p408 = pneg %p103
        $region38: #{tpu_custom_call.1} parent=35 // pred_check_branch
          %410 = sbr.rel (%p408) target = $region40
        $region39: #{tpu_custom_call.1} parent=35 // pred_region
          %s411 = sand.u32 %s88, 1
          %s412 = scalar_lea.sflag [#allocation3], %s411
          %s413 = sand.u32 %s88, 1
          %s414 = smul.addr %s413, 16
          %s415 = scalar_lea.vmem [#allocation2], %s414
          %417 = dma.done %s412, 256
        $region40: #{tpu_custom_call.1} parent=35 // pred_fallthru
          _
      $region36: #{tpu_custom_call.1} parent=5 // pred_fallthru
        _
    $region6: #{tpu_custom_call.1} parent=1 // loop_footer
      %s15 = sadd.s32 1, %s11
    $region7: #{tpu_custom_call.1} parent=1 // loop_footer_branch
      %10 = sbr.rel target = $region3
    $region8: #{tpu_custom_call.1} parent=1 // loop_exit
      _
    %418 = vsyncpa [#allocation3], 1
    %s419 = scalar_lea.sflag [#allocation3], 1
    %420 = vsyncpa %s419, 1

</llo_original>
